<compile_context>
chip_gen: v7x
topology: tpu7x:2x2x1
jax: 0.10.0
libtpu: 0.0.40
codegen_flags: <defaults>
</compile_context>

<pallas_src>
import functools

import jax
import jax.numpy as jnp
from jax import lax
from jax.experimental import pallas as pl
from jax.experimental.pallas import tpu as pltpu


def _conv_body(x_ref, prev_ref, next_ref, w_ref, b_ref, o_ref, *,
               kernel_size, dilation, left, next_w, tile_l, valid_len,
               mask_tail, use_mxu):
    """One (batch, L-tile) grid step of the causal conv, NCL layout.

    x_ref    : (1, C_in, CW)        current input tile (length on lanes)
    prev_ref : (1, C_in, 128)|None  128 input columns just before the tile
    next_ref : (1, C_in, 128)|None  128 input columns just after the tile
    w_ref    : (C_out, K*C_in)      weight with taps folded into contraction
    b_ref    : (C_out, 1)           bias column (lane-broadcast)
    o_ref    : (1, C_out, W)        output tile (lane-dense store)
    """
    j = pl.program_id(1)
    c_in = x_ref.shape[1]
    c_out = o_ref.shape[1]
    width = o_ref.shape[-1]           # output columns produced by this step
    cw = x_ref.shape[-1]              # input columns in the current block

    x_cur = x_ref[0]                  # native dtype: no f32 upcast of operands
    if mask_tail:
        # Zero columns at/after the true sequence end (fused right padding).
        col = j * tile_l + lax.broadcasted_iota(jnp.int32, (1, cw), 1)
        x_cur = jnp.where(col < valid_len, x_cur, jnp.zeros_like(x_cur))

    # Left context: the `left` input columns immediately before this tile.
    # Zeroed outside [0, valid_len) -> the fused causal left padding.
    prev = None
    if left > 0:
        if prev_ref is not None:
            prev = prev_ref[0][:, prev_ref.shape[-1] - left:]
            pcol = (j * tile_l - left
                    + lax.broadcasted_iota(jnp.int32, (1, left), 1))
            prev = jnp.where((pcol >= 0) & (pcol < valid_len), prev,
                             jnp.zeros_like(prev))
        else:                         # single-tile path: pure zero padding
            prev = jnp.zeros((c_in, left), x_cur.dtype)

    # Right context: only needed when left_padding < (K-1)*dilation (or for
    # the virtual right padding on the single-tile path).
    nxt = None
    if next_w > 0:
        if next_ref is not None:
            nxt = next_ref[0][:, :next_w]
            ncol = (j * tile_l + cw
                    + lax.broadcasted_iota(jnp.int32, (1, next_w), 1))
            nxt = jnp.where(ncol < valid_len, nxt, jnp.zeros_like(nxt))
        else:
            nxt = jnp.zeros((c_in, next_w), x_cur.dtype)

    def tap_rows(rel):
        # Columns [rel, rel + width) of the virtual array [prev | x_cur | nxt]
        # (column 0 == first column of x_cur).  All offsets are static.
        s, e = rel, rel + width
        pieces = []
        if s < 0:
            pieces.append(prev[:, left + s:left + min(e, 0)])
        cs, ce = max(s, 0), min(e, cw)
        if ce > cs:
            pieces.append(x_cur[:, cs:ce])
        if e > cw:
            pieces.append(nxt[:, max(s, cw) - cw:e - cw])
        return pieces[0] if len(pieces) == 1 else jnp.concatenate(pieces, -1)

    rels = [k * dilation - left for k in range(kernel_size)]
    w_all = w_ref[...]                                  # tiny, VMEM resident

    if use_mxu:
        # Fold the K taps into one contraction: a single MXU dot per tile and
        # a single f32 accumulator write (no per-tap read-modify-write).
        x2 = jnp.concatenate([tap_rows(r) for r in rels], axis=0)
        acc = lax.dot_general(w_all, x2, (((1,), (0,)), ((), ())),
                              preferred_element_type=jnp.float32)
    else:
        # Tiny channel counts: VPU broadcast-FMAs (an ~(8 x 12) MXU tile would
        # bottleneck on RHS streaming); the length axis stays on lanes.
        acc = jnp.zeros((c_out, width), jnp.float32)
        for k, rel in enumerate(rels):
            rows = tap_rows(rel)
            for ci in range(c_in):
                idx = k * c_in + ci
                w_col = w_all[:, idx:idx + 1].astype(jnp.float32)
                acc = acc + w_col * rows[ci:ci + 1, :]

    acc = acc + b_ref[...].astype(jnp.float32)          # (C_out, 1) broadcast
    o_ref[0] = acc.astype(o_ref.dtype)


def _kernel_single(x_ref, w_ref, b_ref, o_ref, **cfg):
    _conv_body(x_ref, None, None, w_ref, b_ref, o_ref, **cfg)


def _kernel_multi(x_ref, prev_ref, next_ref, w_ref, b_ref, o_ref, **cfg):
    _conv_body(x_ref, prev_ref, next_ref, w_ref, b_ref, o_ref, **cfg)


def quantized_causal_conv1d(x_ncl, weight, bias=None, *, left_padding=None,
                            right_padding=0, dilation=1, tile_l=None):
    """Forward pass of QuantizedCausalConv1D (float mode: Quant/DeQuant = id).

    x_ncl:  (N, C_in, L)        PyTorch NCL layout
    weight: (C_out, C_in, K)    PyTorch Conv1d weight layout
    bias:   (C_out,) or None
    Returns (N, C_out, L_out), L_out = L + left + right - (K-1)*dilation.
    """
    n, c_in, length = x_ncl.shape
    c_out, c_in_w, k = weight.shape
    assert c_in == c_in_w, (c_in, c_in_w)
    if left_padding is None:
        left_padding = k - 1                    # module default: causal
    if bias is None:
        bias = jnp.zeros((c_out,), x_ncl.dtype)

    halo = (k - 1) * dilation                   # receptive-field span - 1
    out_len = length + left_padding + right_padding - halo
    assert out_len >= 1, (length, left_padding, right_padding, halo)
    mask_tail = right_padding > 0               # only then do valid outputs
                                                # reach input columns >= L
    use_mxu = (c_in * k) > 16
    dt_bytes = jnp.dtype(x_ncl.dtype).itemsize

    # ---- per-generation tile size & VMEM budget -----------------------------
    try:
        vmem_cap = int(pltpu.get_tpu_info().vmem_capacity_bytes)
    except Exception:                           # pragma: no cover
        vmem_cap = 64 * 1024 * 1024             # conservative: v7x per-core
    budget = (20 << 20) if vmem_cap >= (96 << 20) else (10 << 20)
    per_col = (2 * (c_in + c_out) * dt_bytes    # double-buffered in + out
               + (k + 1) * c_in * dt_bytes      # tap slices / folded RHS
               + c_out * 4 + c_in * 4)          # f32 accumulator + slack
    cap = max(128, min(32768, (budget // per_col) // 128 * 128))
    if tile_l is None:
        tile_l = cap

    single = (tile_l >= out_len) or (length < 128)
    if not single:
        # Lane dims of every block must be a multiple of 128 (or full extent).
        tile_l = max(128, (min(tile_l, length) // 128) * 128)
        single = tile_l >= out_len
    if single:
        tile_l = out_len
        num_l_tiles = 1
    else:
        num_l_tiles = pl.cdiv(out_len, tile_l)
        assert left_padding <= 128 and halo <= 128, (
            "TODO(synk): contexts wider than one 128-column halo block")

    # Weight with taps folded into the contraction dim: w2[co, kk*C_in + ci]
    # == weight[co, ci, kk]; tiny array, VMEM-resident across the grid.
    w2 = jnp.transpose(weight, (0, 2, 1)).reshape(c_out, k * c_in)
    b_col = bias.reshape(c_out, 1)

    cfg = dict(kernel_size=k, dilation=dilation, left=left_padding,
               tile_l=tile_l, valid_len=length, mask_tail=mask_tail,
               use_mxu=use_mxu)
    out_spec = pl.BlockSpec((1, c_out, tile_l), lambda b, j: (b, 0, j))

    if single:
        kern = functools.partial(_kernel_single, next_w=max(right_padding, 0),
                                 **cfg)
        in_specs = [
            pl.BlockSpec((1, c_in, length), lambda b, j: (b, 0, 0)),
            pl.BlockSpec((c_out, k * c_in), lambda b, j: (0, 0)),
            pl.BlockSpec((c_out, 1), lambda b, j: (0, 0)),
        ]
        operands = (x_ncl, w2, b_col)
        halo_bytes = 0
    else:
        r = tile_l // 128
        n128 = pl.cdiv(length, 128)
        nblk = pl.cdiv(length, tile_l)
        kern = functools.partial(_kernel_multi,
                                 next_w=max(halo - left_padding, 0), **cfg)
        in_specs = [
            # Current tile (clamped so overhang output tiles never index past
            # the last input block; that data is masked or discarded).
            pl.BlockSpec((1, c_in, tile_l),
                         lambda b, j: (b, 0, jnp.minimum(j, nblk - 1))),
            # 128-column halo just BEFORE the tile (replaces the sequential
            # carry scratch -> no cross-tile state, length axis is parallel).
            pl.BlockSpec((1, c_in, 128),
                         lambda b, j: (b, 0, jnp.minimum(
                             jnp.maximum(j * r - 1, 0), n128 - 1))),
            # 128-column halo just AFTER the tile (read only when
            # left_padding < (K-1)*dilation).
            pl.BlockSpec((1, c_in, 128),
                         lambda b, j: (b, 0, jnp.minimum((j + 1) * r,
                                                         n128 - 1))),
            pl.BlockSpec((c_out, k * c_in), lambda b, j: (0, 0)),
            pl.BlockSpec((c_out, 1), lambda b, j: (0, 0)),
        ]
        operands = (x_ncl, x_ncl, x_ncl, w2, b_col)
        halo_bytes = 2 * c_in * 128 * dt_bytes

    # vmem_limit from the actual block bytes + headroom (not a fixed 48 MiB,
    # which would already be 75% of v7x's per-core VMEM).
    blk_bytes = (c_in + c_out) * tile_l * dt_bytes + halo_bytes
    w_bytes = (c_out * k * c_in + c_out) * dt_bytes
    interm = (k + 1) * c_in * tile_l * dt_bytes + c_out * tile_l * 4
    vmem_limit = 2 * (blk_bytes + w_bytes) + 2 * interm + (8 << 20)
    vmem_limit = int(min(max(vmem_limit, 32 << 20), int(vmem_cap * 0.9)))

    return pl.pallas_call(
        kern,
        out_shape=jax.ShapeDtypeStruct((n, c_out, out_len), x_ncl.dtype),
        grid_spec=pltpu.PrefetchScalarGridSpec(
            num_scalar_prefetch=0,
            grid=(n, num_l_tiles),
            in_specs=in_specs,
            out_specs=out_spec,
        ),
        compiler_params=pltpu.CompilerParams(
            # No cross-tile state -> both grid axes are independent, so the
            # v7x dual-TC / megacore split can use batch OR length.
            dimension_semantics=("parallel", "parallel"),
            vmem_limit_bytes=vmem_limit),
    )(*operands)


# ----------------------------- self-test --------------------------------------


def _reference_conv(x, w, b, left, right, dilation):
    x_pad = jnp.pad(x, ((0, 0), (0, 0), (left, right)))
    out = lax.conv_general_dilated(
        x_pad, w, window_strides=(1,), padding=((0, 0),),
        rhs_dilation=(dilation,),
        dimension_numbers=("NCH", "OIH", "NCH"),
        precision=lax.Precision.HIGHEST)
    return out + b[None, :, None]


def _run_case(key, n, c_in, c_out, k, l, *, left=None, right=0, dilation=1,
              tile_l=None, tol=1e-5):
    kx, kw, kb = jax.random.split(key, 3)
    x = jax.random.normal(kx, (n, c_in, l), dtype=jnp.float32)
    bound = 1.0 / float((c_in * k) ** 0.5)
    w = jax.random.uniform(kw, (c_out, c_in, k), minval=-bound, maxval=bound,
                           dtype=jnp.float32)
    b = jax.random.uniform(kb, (c_out,), minval=-bound, maxval=bound,
                           dtype=jnp.float32)

    out = quantized_causal_conv1d(x, w, b, left_padding=left,
                                  right_padding=right, dilation=dilation,
                                  tile_l=tile_l)
    out = jax.block_until_ready(out)

    ref = _reference_conv(x, w, b, (k - 1) if left is None else left, right,
                          dilation)
    assert out.shape == ref.shape, (out.shape, ref.shape)
    err = float(jnp.max(jnp.abs(out - ref)))
    assert jnp.allclose(out, ref, atol=tol, rtol=tol), err


if __name__ == "__main__":
    key = jax.random.PRNGKey(0)
    ks = jax.random.split(key, 5)

    # 1) Module defaults (causal, dilation=1): tiny channels, single tile,
    #    VPU broadcast-FMA path.
    _run_case(ks[0], n=2, c_in=4, c_out=8, k=3, l=16)

    # 2) Larger channels: folded-K MXU dot, multiple L-tiles with halo blocks.
    _run_case(ks[1], n=1, c_in=128, c_out=128, k=3, l=512, tile_l=128,
              tol=1e-4)

    # 3) Explicit asymmetric padding + dilation on the MXU path: exercises the
    #    fused right-pad masking, the overhang output tile and the next-halo.
    _run_case(ks[2], n=2, c_in=8, c_out=16, k=3, l=256, left=3, right=2,
              dilation=2, tile_l=128, tol=1e-4)

    # 4) Tiny channels across multiple L-tiles: VPU path + prev-halo block.
    _run_case(ks[3], n=2, c_in=4, c_out=8, k=3, l=512, tile_l=128)

    # 5) left < (K-1)*dilation with right padding on the VPU path: exercises
    #    the next-halo block and both boundary masks.
    _run_case(ks[4], n=1, c_in=4, c_out=8, k=3, l=384, left=1, right=1,
              dilation=2, tile_l=128)

    print("KERNEL_OK")
</pallas_src>

<mosaic_0001>
module attributes {stable_mosaic.version = 11 : i64} {
  func.func @_kernel_single(%arg0: i32, %arg1: i32, %arg2: memref<1x4x16xf32, #tpu.memory_space<vmem>>, %arg3: memref<8x12xf32, #tpu.memory_space<vmem>>, %arg4: memref<8x1xf32, #tpu.memory_space<vmem>>, %arg5: memref<1x8x16xf32, #tpu.memory_space<vmem>>) attributes {dimension_semantics = [#tpu.dimension_semantics<parallel>, #tpu.dimension_semantics<parallel>], iteration_bounds = array<i64: 2, 1>, scalar_prefetch = 0 : i64, scratch_operands = 0 : i64, tpu.core_type = #tpu.core_type<tc>, window_params = [{transform_indices = @transform_0, window_bounds = array<i64: 1, 4, 16>}, {pipeline_mode = #tpu.pipeline_mode<synchronous>, transform_indices = @transform_1, window_bounds = array<i64: 8, 12>}, {pipeline_mode = #tpu.pipeline_mode<synchronous>, transform_indices = @transform_2, window_bounds = array<i64: 8, 1>}, {transform_indices = @transform_3, window_bounds = array<i64: 1, 8, 16>}]} {
    %c0 = arith.constant 0 : index
    %c0_0 = arith.constant 0 : index
    %c0_1 = arith.constant 0 : index
    %0 = vector.load %arg2[%c0, %c0_0, %c0_1] : memref<1x4x16xf32, #tpu.memory_space<vmem>>, vector<1x4x16xf32>
    %1 = vector.shape_cast %0 : vector<1x4x16xf32> to vector<4x16xf32>
    %cst = arith.constant 0.000000e+00 : f32
    %2 = vector.broadcast %cst : f32 to vector<4x2xf32>
    %c0_2 = arith.constant 0 : index
    %c0_3 = arith.constant 0 : index
    %3 = vector.load %arg3[%c0_2, %c0_3] : memref<8x12xf32, #tpu.memory_space<vmem>>, vector<8x12xf32>
    %cst_4 = arith.constant 0.000000e+00 : f32
    %4 = vector.broadcast %cst_4 : f32 to vector<8x16xf32>
    %5 = vector.extract_strided_slice %1 {offsets = [0, 0], sizes = [4, 14], strides = [1, 1]} : vector<4x16xf32> to vector<4x14xf32>
    %6 = tpu.concatenate %2, %5 in 1 : vector<4x2xf32>, vector<4x14xf32> -> vector<4x16xf32>
    %7 = vector.extract_strided_slice %3 {offsets = [0, 0], sizes = [8, 1], strides = [1, 1]} : vector<8x12xf32> to vector<8x1xf32>
    %8 = vector.extract_strided_slice %6 {offsets = [0, 0], sizes = [1, 16], strides = [1, 1]} : vector<4x16xf32> to vector<1x16xf32>
    %9 = vector.broadcast %7 : vector<8x1xf32> to vector<8x16xf32>
    %10 = vector.broadcast %8 : vector<1x16xf32> to vector<8x16xf32>
    %11 = arith.mulf %9, %10 : vector<8x16xf32>
    %12 = arith.addf %4, %11 : vector<8x16xf32>
    %13 = vector.extract_strided_slice %3 {offsets = [0, 1], sizes = [8, 1], strides = [1, 1]} : vector<8x12xf32> to vector<8x1xf32>
    %14 = vector.extract_strided_slice %6 {offsets = [1, 0], sizes = [1, 16], strides = [1, 1]} : vector<4x16xf32> to vector<1x16xf32>
    %15 = vector.broadcast %13 : vector<8x1xf32> to vector<8x16xf32>
    %16 = vector.broadcast %14 : vector<1x16xf32> to vector<8x16xf32>
    %17 = arith.mulf %15, %16 : vector<8x16xf32>
    %18 = arith.addf %12, %17 : vector<8x16xf32>
    %19 = vector.extract_strided_slice %3 {offsets = [0, 2], sizes = [8, 1], strides = [1, 1]} : vector<8x12xf32> to vector<8x1xf32>
    %20 = vector.extract_strided_slice %6 {offsets = [2, 0], sizes = [1, 16], strides = [1, 1]} : vector<4x16xf32> to vector<1x16xf32>
    %21 = vector.broadcast %19 : vector<8x1xf32> to vector<8x16xf32>
    %22 = vector.broadcast %20 : vector<1x16xf32> to vector<8x16xf32>
    %23 = arith.mulf %21, %22 : vector<8x16xf32>
    %24 = arith.addf %18, %23 : vector<8x16xf32>
    %25 = vector.extract_strided_slice %3 {offsets = [0, 3], sizes = [8, 1], strides = [1, 1]} : vector<8x12xf32> to vector<8x1xf32>
    %26 = vector.extract_strided_slice %6 {offsets = [3, 0], sizes = [1, 16], strides = [1, 1]} : vector<4x16xf32> to vector<1x16xf32>
    %27 = vector.broadcast %25 : vector<8x1xf32> to vector<8x16xf32>
    %28 = vector.broadcast %26 : vector<1x16xf32> to vector<8x16xf32>
    %29 = arith.mulf %27, %28 : vector<8x16xf32>
    %30 = arith.addf %24, %29 : vector<8x16xf32>
    %31 = vector.extract_strided_slice %2 {offsets = [0, 1], sizes = [4, 1], strides = [1, 1]} : vector<4x2xf32> to vector<4x1xf32>
    %32 = vector.extract_strided_slice %1 {offsets = [0, 0], sizes = [4, 15], strides = [1, 1]} : vector<4x16xf32> to vector<4x15xf32>
    %33 = tpu.concatenate %31, %32 in 1 : vector<4x1xf32>, vector<4x15xf32> -> vector<4x16xf32>
    %34 = vector.extract_strided_slice %3 {offsets = [0, 4], sizes = [8, 1], strides = [1, 1]} : vector<8x12xf32> to vector<8x1xf32>
    %35 = vector.extract_strided_slice %33 {offsets = [0, 0], sizes = [1, 16], strides = [1, 1]} : vector<4x16xf32> to vector<1x16xf32>
    %36 = vector.broadcast %34 : vector<8x1xf32> to vector<8x16xf32>
    %37 = vector.broadcast %35 : vector<1x16xf32> to vector<8x16xf32>
    %38 = arith.mulf %36, %37 : vector<8x16xf32>
    %39 = arith.addf %30, %38 : vector<8x16xf32>
    %40 = vector.extract_strided_slice %3 {offsets = [0, 5], sizes = [8, 1], strides = [1, 1]} : vector<8x12xf32> to vector<8x1xf32>
    %41 = vector.extract_strided_slice %33 {offsets = [1, 0], sizes = [1, 16], strides = [1, 1]} : vector<4x16xf32> to vector<1x16xf32>
    %42 = vector.broadcast %40 : vector<8x1xf32> to vector<8x16xf32>
    %43 = vector.broadcast %41 : vector<1x16xf32> to vector<8x16xf32>
    %44 = arith.mulf %42, %43 : vector<8x16xf32>
    %45 = arith.addf %39, %44 : vector<8x16xf32>
    %46 = vector.extract_strided_slice %3 {offsets = [0, 6], sizes = [8, 1], strides = [1, 1]} : vector<8x12xf32> to vector<8x1xf32>
    %47 = vector.extract_strided_slice %33 {offsets = [2, 0], sizes = [1, 16], strides = [1, 1]} : vector<4x16xf32> to vector<1x16xf32>
    %48 = vector.broadcast %46 : vector<8x1xf32> to vector<8x16xf32>
    %49 = vector.broadcast %47 : vector<1x16xf32> to vector<8x16xf32>
    %50 = arith.mulf %48, %49 : vector<8x16xf32>
    %51 = arith.addf %45, %50 : vector<8x16xf32>
    %52 = vector.extract_strided_slice %3 {offsets = [0, 7], sizes = [8, 1], strides = [1, 1]} : vector<8x12xf32> to vector<8x1xf32>
    %53 = vector.extract_strided_slice %33 {offsets = [3, 0], sizes = [1, 16], strides = [1, 1]} : vector<4x16xf32> to vector<1x16xf32>
    %54 = vector.broadcast %52 : vector<8x1xf32> to vector<8x16xf32>
    %55 = vector.broadcast %53 : vector<1x16xf32> to vector<8x16xf32>
    %56 = arith.mulf %54, %55 : vector<8x16xf32>
    %57 = arith.addf %51, %56 : vector<8x16xf32>
    %58 = vector.extract_strided_slice %3 {offsets = [0, 8], sizes = [8, 1], strides = [1, 1]} : vector<8x12xf32> to vector<8x1xf32>
    %59 = vector.extract_strided_slice %1 {offsets = [0, 0], sizes = [1, 16], strides = [1, 1]} : vector<4x16xf32> to vector<1x16xf32>
    %60 = vector.broadcast %58 : vector<8x1xf32> to vector<8x16xf32>
    %61 = vector.broadcast %59 : vector<1x16xf32> to vector<8x16xf32>
    %62 = arith.mulf %60, %61 : vector<8x16xf32>
    %63 = arith.addf %57, %62 : vector<8x16xf32>
    %64 = vector.extract_strided_slice %3 {offsets = [0, 9], sizes = [8, 1], strides = [1, 1]} : vector<8x12xf32> to vector<8x1xf32>
    %65 = vector.extract_strided_slice %1 {offsets = [1, 0], sizes = [1, 16], strides = [1, 1]} : vector<4x16xf32> to vector<1x16xf32>
    %66 = vector.broadcast %64 : vector<8x1xf32> to vector<8x16xf32>
    %67 = vector.broadcast %65 : vector<1x16xf32> to vector<8x16xf32>
    %68 = arith.mulf %66, %67 : vector<8x16xf32>
    %69 = arith.addf %63, %68 : vector<8x16xf32>
    %70 = vector.extract_strided_slice %3 {offsets = [0, 10], sizes = [8, 1], strides = [1, 1]} : vector<8x12xf32> to vector<8x1xf32>
    %71 = vector.extract_strided_slice %1 {offsets = [2, 0], sizes = [1, 16], strides = [1, 1]} : vector<4x16xf32> to vector<1x16xf32>
    %72 = vector.broadcast %70 : vector<8x1xf32> to vector<8x16xf32>
    %73 = vector.broadcast %71 : vector<1x16xf32> to vector<8x16xf32>
    %74 = arith.mulf %72, %73 : vector<8x16xf32>
    %75 = arith.addf %69, %74 : vector<8x16xf32>
    %76 = vector.extract_strided_slice %3 {offsets = [0, 11], sizes = [8, 1], strides = [1, 1]} : vector<8x12xf32> to vector<8x1xf32>
    %77 = vector.extract_strided_slice %1 {offsets = [3, 0], sizes = [1, 16], strides = [1, 1]} : vector<4x16xf32> to vector<1x16xf32>
    %78 = vector.broadcast %76 : vector<8x1xf32> to vector<8x16xf32>
    %79 = vector.broadcast %77 : vector<1x16xf32> to vector<8x16xf32>
    %80 = arith.mulf %78, %79 : vector<8x16xf32>
    %81 = arith.addf %75, %80 : vector<8x16xf32>
    %c0_5 = arith.constant 0 : index
    %c0_6 = arith.constant 0 : index
    %82 = vector.load %arg4[%c0_5, %c0_6] : memref<8x1xf32, #tpu.memory_space<vmem>>, vector<8x1xf32>
    %83 = vector.broadcast %82 : vector<8x1xf32> to vector<8x16xf32>
    %84 = arith.addf %81, %83 : vector<8x16xf32>
    %c0_7 = arith.constant 0 : index
    %c0_8 = arith.constant 0 : index
    %c0_9 = arith.constant 0 : index
    %85 = vector.load %arg5[%c0_7, %c0_8, %c0_9] : memref<1x8x16xf32, #tpu.memory_space<vmem>>, vector<1x8x16xf32>
    %86 = vector.shape_cast %85 : vector<1x8x16xf32> to vector<8x16xf32>
    %87 = vector.shape_cast %84 : vector<8x16xf32> to vector<1x8x16xf32>
    tpu.vector_store %arg5[%c0_7, %c0_8, %c0_9], %87 {strides = array<i32>} : memref<1x8x16xf32, #tpu.memory_space<vmem>>, vector<1x8x16xf32>,
    return
  }
  func.func @transform_0(%arg0: i32, %arg1: i32) -> (i32, i32, i32) {
    %c0_i32 = arith.constant 0 : i32
    %c0_i32_0 = arith.constant 0 : i32
    %c0_i32_1 = arith.constant 0 : i32
    return %arg0, %c0_i32, %c0_i32_0 : i32, i32, i32
  }
  func.func @transform_1(%arg0: i32, %arg1: i32) -> (i32, i32) {
    %c0_i32 = arith.constant 0 : i32
    %c0_i32_0 = arith.constant 0 : i32
    %c0_i32_1 = arith.constant 0 : i32
    return %c0_i32, %c0_i32_0 : i32, i32
  }
  func.func @transform_2(%arg0: i32, %arg1: i32) -> (i32, i32) {
    %c0_i32 = arith.constant 0 : i32
    %c0_i32_0 = arith.constant 0 : i32
    %c0_i32_1 = arith.constant 0 : i32
    return %c0_i32, %c0_i32_0 : i32, i32
  }
  func.func @transform_3(%arg0: i32, %arg1: i32) -> (i32, i32, i32) {
    %c0_i32 = arith.constant 0 : i32
    %c0_i32_0 = arith.constant 0 : i32
    return %arg0, %c0_i32, %arg1 : i32, i32, i32
  }
}

</mosaic_0001>

<llo_original>
// kernel: tpu_custom_call.1
$region0: #{tpu_custom_call.1}
  #allocation0 [shape = 'u32[]', space=smem, size = 0x4, offset = 0x4, fixed_abs, tag = 'smem constant byte address 0x4 - core index']
  #allocation1 [shape = 'u32[144,128]{1,0:T(1,128)}', space=vmem, size = 0x12000, scoped, tag = 'internal scratch']
  %s0 = inlined_call_operand.vmem [shape: f32[2,4,16], index: 0, kind: input, shape index: {}]
  %s1 = inlined_call_operand.hbm [shape: f32[8,12], index: 1, kind: input, shape index: {}]
  %s2 = inlined_call_operand.vmem [shape: f32[8,1], index: 2, kind: input, shape index: {}]
  %s3 = inlined_call_operand.hbm [shape: f32[2,8,16], index: 3, kind: output, shape index: {}]
  %s4 = sld [smem:[#allocation0]]
  $region49: #{tpu_custom_call.1} parent=0
    _
  %s6 = ssub.s32 1, %s4
  %s7 = scalar_select 0, %s6, %s4
  $region1: #{tpu_custom_call.1} parent=0
    #allocation2 [shape = 'u8[4096]{0}', space=vmem, size = 0x1000, scoped, tag = 'input window, operand 1, single buffered']
    #allocation3 [shape = 's32[2]{0}', space=sflag, size = 0x8, scoped, tag = 'scoped memory for tpu_custom_call.1']
    #allocation4 [shape = 's32[2]{0}', space=sflag, size = 0x8, scoped, tag = 'scoped memory for tpu_custom_call.1']
    #allocation5 [shape = 'u8[8192]{0}', space=vmem, size = 0x2000, scoped, tag = 'output window, operand 0']
    %8 = vsyncpa [#allocation3], 0
    %9 = vsyncpa [#allocation4], 0
    %s10 = scalar_lea.sflag [#allocation4], 1
    %11 = vsyncpa %s10, 0
    loop: start=0, step=1, limit=4
    $region2: #{tpu_custom_call.1} parent=1 // loop_pre_header
      _
    $region3: #{tpu_custom_call.1} parent=1 // loop_header
      %s13 = sphi 0, %s17
      %p14 = scmp.ge.s32.totalorder %s13, 4
      %s20 = sphi 0, %s32
      %s21 = sphi 0, %s28
      %s22 = sphi 0, %s20
      %s23 = sphi 0, %s21
      %s24 = sphi 0, %s22
      %s25 = sphi 0, %s23
      %s35 = sphi 0, %s37
      %s38 = sphi 0, %s35
      %s39 = sphi 0, %s38
      %s55 = sphi 0, %s39
      %s59 = sphi 0, %s59
      %s61 = sphi 0, %s59
      %s62 = sphi 0, %s61
      %s76 = sphi 0, %s62
      %s80 = sphi 0, %s80
      %s82 = sphi 0, %s80
      %s83 = sphi 0, %s82
      %s97 = sphi 0, %s83
      %s105 = sphi 0, %s107
      %s108 = sphi 0, %s105
      %s109 = sphi 0, %s108
      %s125 = sphi 0, %s109
    $region4: #{tpu_custom_call.1} parent=1 // loop_header_branch
      %16 = sbr.rel (%p14) target = $region8
    $region5: #{tpu_custom_call.1} parent=1 // loop_body
      %s18 = ssub.s32 %s13, 1
      %s19 = ssub.s32 %s13, 2
      %s26 = sadd.s32 1, %s21
      %p27 = scmp.ge.s32.totalorder %s26, 1
      %s28 = scalar_select %p27, 0, %s26
      %s29 = sadd.s32 1, %s20
      %s30 = scalar_select %p27, %s29, %s20
      %p31 = scmp.ge.s32.totalorder %s30, 2
      %s32 = scalar_select %p31, 0, %s30
      %s33 = ssub.s32 %s20, %s32
      %p34 = scmp.eq.s32.totalorder %s33, 0
      %s36 = sadd.s32 %s35, 1
      %s37 = scalar_select %p34, %s35, %s36
      %p40 = pneg %p34
      %p41 = scmp.eq.s32.totalorder %s13, 1
      %p42 = por %p40, %p41
      %p43 = scmp.ne.s32.totalorder %s35, %s38
      %p44 = scmp.eq.s32.totalorder %s13, 0
      %p45 = por %p43, %p44
      %p46 = scmp.ne.s32.totalorder %s35, %s38
      %p47 = scmp.eq.s32.totalorder %s18, 1
      %p48 = por %p46, %p47
      %p49 = scmp.ne.s32.totalorder %s38, %s39
      %p50 = scmp.eq.s32.totalorder %s18, 0
      %p51 = por %p49, %p50
      %p52 = scmp.ne.s32.totalorder %s38, %s39
      %p53 = scmp.eq.s32.totalorder %s19, 1
      %p54 = por %p52, %p53
      %p56 = scmp.ne.s32.totalorder %s39, %s55
      %p57 = scmp.eq.s32.totalorder %s19, 0
      %p58 = por %p56, %p57
      %s60 = sadd.s32 %s59, 1
      %p63 = scmp.eq.s32.totalorder %s13, 1
      %p64 = scmp.ne.s32.totalorder %s59, %s61
      %p65 = scmp.eq.s32.totalorder %s13, 0
      %p66 = por %p64, %p65
      %p67 = scmp.ne.s32.totalorder %s59, %s61
      %p68 = scmp.eq.s32.totalorder %s18, 1
      %p69 = por %p67, %p68
      %p70 = scmp.ne.s32.totalorder %s61, %s62
      %p71 = scmp.eq.s32.totalorder %s18, 0
      %p72 = por %p70, %p71
      %p73 = scmp.ne.s32.totalorder %s61, %s62
      %p74 = scmp.eq.s32.totalorder %s19, 1
      %p75 = por %p73, %p74
      %p77 = scmp.ne.s32.totalorder %s62, %s76
      %p78 = scmp.eq.s32.totalorder %s19, 0
      %p79 = por %p77, %p78
      %s81 = sadd.s32 %s80, 1
      %p84 = scmp.eq.s32.totalorder %s13, 1
      %p85 = scmp.ne.s32.totalorder %s80, %s82
      %p86 = scmp.eq.s32.totalorder %s13, 0
      %p87 = por %p85, %p86
      %p88 = scmp.ne.s32.totalorder %s80, %s82
      %p89 = scmp.eq.s32.totalorder %s18, 1
      %p90 = por %p88, %p89
      %p91 = scmp.ne.s32.totalorder %s82, %s83
      %p92 = scmp.eq.s32.totalorder %s18, 0
      %p93 = por %p91, %p92
      %p94 = scmp.ne.s32.totalorder %s82, %s83
      %p95 = scmp.eq.s32.totalorder %s19, 1
      %p96 = por %p94, %p95
      %p98 = scmp.ne.s32.totalorder %s83, %s97
      %p99 = scmp.eq.s32.totalorder %s19, 0
      %p100 = por %p98, %p99
      %s101 = ssub.s32 %s20, %s32
      %s102 = ssub.s32 %s21, %s28
      %s103 = sor.u32 %s101, %s102
      %p104 = scmp.eq.s32.totalorder %s103, 0
      %s106 = sadd.s32 %s105, 1
      %s107 = scalar_select %p104, %s105, %s106
      %p110 = pneg %p104
      %p111 = scmp.eq.s32.totalorder %s13, 1
      %p112 = por %p110, %p111
      %p113 = scmp.ne.s32.totalorder %s105, %s108
      %p114 = scmp.eq.s32.totalorder %s13, 0
      %p115 = por %p113, %p114
      %p116 = scmp.ne.s32.totalorder %s105, %s108
      %p117 = scmp.eq.s32.totalorder %s18, 1
      %p118 = por %p116, %p117
      %p119 = scmp.ne.s32.totalorder %s108, %s109
      %p120 = scmp.eq.s32.totalorder %s18, 0
      %p121 = por %p119, %p120
      %p122 = scmp.ne.s32.totalorder %s108, %s109
      %p123 = scmp.eq.s32.totalorder %s19, 1
      %p124 = por %p122, %p123
      %p126 = scmp.ne.s32.totalorder %s109, %s125
      %p127 = scmp.eq.s32.totalorder %s19, 0
      %p128 = por %p126, %p127
      %p129 = scmp.le.s32.totalorder 1, %s13
      %p130 = scmp.lt.s32.totalorder %s13, 3
      %p131 = pnand %p129, %p130
      %p132 = pneg %p131
      // Predicated region
      $region9: #{tpu_custom_call.1} parent=5 // pred_check
        _
      $region10: #{tpu_custom_call.1} parent=5 // pred_check_branch
        %134 = sbr.rel (%p131) target = $region12
      $region11: #{tpu_custom_call.1} parent=5 // pred_region
        %s135 = ssub.s32 %s13, 1
        // Predicated region
        $region13: #{tpu_custom_call.1} parent=11 // pred_check
          %p136 = pneg %p72
        $region14: #{tpu_custom_call.1} parent=11 // pred_check_branch
          %138 = sbr.rel (%p136) target = $region16
        $region15: #{tpu_custom_call.1} parent=11 // pred_region
          %s140 = ssub.s32 128, 128
          %141 = vsyncadd [#allocation3], %s140
          %s143 = sshll.u32 [#allocation2], 4
          %s144 = int_to_ptr.vmem [resolvable:$true] %s143
          %146 = dma.hbm_to_vmem [thread:$0]  %s1, 128, %s144, [#allocation3]
        $region16: #{tpu_custom_call.1} parent=11 // pred_fallthru
          _
        // Predicated region
        $region17: #{tpu_custom_call.1} parent=11 // pred_check
          %p147 = pneg %p93
        $region18: #{tpu_custom_call.1} parent=11 // pred_check_branch
          %149 = sbr.rel (%p147) target = $region20
        $region19: #{tpu_custom_call.1} parent=11 // pred_region
          _
        $region20: #{tpu_custom_call.1} parent=11 // pred_fallthru
          _
      $region12: #{tpu_custom_call.1} parent=5 // pred_fallthru
        _
      %p150 = scmp.lt.s32.totalorder %s13, 2
      // Predicated region
      $region21: #{tpu_custom_call.1} parent=5 // pred_check
        %p151 = pneg %p150
      $region22: #{tpu_custom_call.1} parent=5 // pred_check_branch
        %153 = sbr.rel (%p151) target = $region24
      $region23: #{tpu_custom_call.1} parent=5 // pred_region
        // Predicated region
        $region25: #{tpu_custom_call.1} parent=23 // pred_check
          %p154 = pneg %p45
        $region26: #{tpu_custom_call.1} parent=23 // pred_check_branch
          %156 = sbr.rel (%p154) target = $region28
        $region27: #{tpu_custom_call.1} parent=23 // pred_region
          %p157 = scmp.lt.s32.totalorder %s20, 1
          %s158 = scalar_select %p157, %s20, 1
          %s159 = smul.addr %s158, 4
          %s160 = scalar_lea.vmem %s0, %s159
        $region28: #{tpu_custom_call.1} parent=23 // pred_fallthru
          _
      $region24: #{tpu_custom_call.1} parent=5 // pred_fallthru
        _
      %p161 = scmp.le.s32.totalorder 1, %s13
      %p162 = scmp.lt.s32.totalorder %s13, 3
      %p163 = pnand %p161, %p162
      %p164 = pneg %p163
      // Predicated region
      $region29: #{tpu_custom_call.1} parent=5 // pred_check
        _
      $region30: #{tpu_custom_call.1} parent=5 // pred_check_branch
        %166 = sbr.rel (%p163) target = $region32
      $region31: #{tpu_custom_call.1} parent=5 // pred_region
        %s167 = ssub.s32 %s13, 1
        // Predicated region
        $region33: #{tpu_custom_call.1} parent=31 // pred_check
          %p168 = pneg %p72
        $region34: #{tpu_custom_call.1} parent=31 // pred_check_branch
          %170 = sbr.rel (%p168) target = $region36
        $region35: #{tpu_custom_call.1} parent=31 // pred_region
          %171 = dma.done [#allocation3], 128
        $region36: #{tpu_custom_call.1} parent=31 // pred_fallthru
          _
        %p172 = scmp.lt.s32.totalorder %s22, 1
        %s173 = scalar_select %p172, %s22, 1
        %s174 = smul.addr %s173, 4
        %s175 = scalar_lea.vmem %s0, %s174
        %p176 = pneg %p51
        %p177 = pneg %p48
        %p178 = pneg %p72
        %p179 = pneg %p69
        %p180 = pneg %p93
        %p181 = pneg %p90
        %p182 = pneg %p121
        %p183 = pneg %p118
        %s184 = sand.u32 %s108, 1
        %s185 = scalar_lea.sflag [#allocation4], %s184
        %s186 = sand.u32 %s108, 1
        %s187 = smul.addr %s186, 8
        %s188 = scalar_lea.vmem [#allocation5], %s187
        %p189 = scmp.lt.s32.totalorder %s22, 1
        %s190 = scalar_select %p189, %s22, 1
        %s191 = smul.addr %s190, 4
        %s192 = scalar_lea.vmem %s0, %s191
        %v193 = vld [vmem:[%s192] sm:$0xf]
        %v194 = vld [vmem:[#allocation2] sm:$0xff]
        %196 = vrot.lane.b32.xlu0 %v193, 2
        %v197 = vpop.permute.xlu0 %196
        %vm199 = vcmask 15360
        %v200 = vsel %vm199, 0.0, %v197
        %202 = vset.pattern.permute.xlu0 0
        %203 = vperm.xlu0 %202, %v194
        %v204 = vpop.permute.xlu0 %203
        %v206 = vlaneseq
        %v207 = vshrl.u32 %v206, 7
        %v208 = vsub.s32 0, %v207
        %v209 = vrot.slane %v200, %v208
        %v210 = vmul.f32 %v204, %v209
        %v211 = vadd.f32 %v210, 0.0
        %212 = vset.pattern.permute.xlu0 1
        %213 = vperm.xlu0 %212, %v194
        %v214 = vpop.permute.xlu0 %213
        %v216 = vlaneseq
        %v217 = vshrl.u32 %v216, 7
        %v218 = vsub.s32 1, %v217
        %v219 = vrot.slane %v200, %v218
        %v220 = vmul.f32 %v214, %v219
        %v221 = vadd.f32 %v211, %v220
        %222 = vset.pattern.permute.xlu0 2
        %223 = vperm.xlu0 %222, %v194
        %v224 = vpop.permute.xlu0 %223
        %v226 = vlaneseq
        %v227 = vshrl.u32 %v226, 7
        %v228 = vsub.s32 2, %v227
        %v229 = vrot.slane %v200, %v228
        %v230 = vmul.f32 %v224, %v229
        %v231 = vadd.f32 %v221, %v230
        %232 = vset.pattern.permute.xlu0 3
        %233 = vperm.xlu0 %232, %v194
        %v234 = vpop.permute.xlu0 %233
        %v236 = vlaneseq
        %v237 = vshrl.u32 %v236, 7
        %v238 = vsub.s32 3, %v237
        %v239 = vrot.slane %v200, %v238
        %v240 = vmul.f32 %v234, %v239
        %v241 = vadd.f32 %v231, %v240
        %242 = vrot.lane.b32.xlu0 %v193, 1
        %v243 = vpop.permute.xlu0 %242
        %vm245 = vcmask 7168
        %v246 = vsel %vm245, 0.0, %v243
        %247 = vset.pattern.permute.xlu0 4
        %248 = vperm.xlu0 %247, %v194
        %v249 = vpop.permute.xlu0 %248
        %v251 = vlaneseq
        %v252 = vshrl.u32 %v251, 7
        %v253 = vsub.s32 0, %v252
        %v254 = vrot.slane %v246, %v253
        %v255 = vmul.f32 %v249, %v254
        %v256 = vadd.f32 %v241, %v255
        %257 = vset.pattern.permute.xlu0 5
        %258 = vperm.xlu0 %257, %v194
        %v259 = vpop.permute.xlu0 %258
        %v261 = vlaneseq
        %v262 = vshrl.u32 %v261, 7
        %v263 = vsub.s32 1, %v262
        %v264 = vrot.slane %v246, %v263
        %v265 = vmul.f32 %v259, %v264
        %v266 = vadd.f32 %v256, %v265
        %267 = vset.pattern.permute.xlu0 6
        %268 = vperm.xlu0 %267, %v194
        %v269 = vpop.permute.xlu0 %268
        %v271 = vlaneseq
        %v272 = vshrl.u32 %v271, 7
        %v273 = vsub.s32 2, %v272
        %v274 = vrot.slane %v246, %v273
        %v275 = vmul.f32 %v269, %v274
        %v276 = vadd.f32 %v266, %v275
        %277 = vset.pattern.permute.xlu0 7
        %278 = vperm.xlu0 %277, %v194
        %v279 = vpop.permute.xlu0 %278
        %v281 = vlaneseq
        %v282 = vshrl.u32 %v281, 7
        %v283 = vsub.s32 3, %v282
        %v284 = vrot.slane %v246, %v283
        %v285 = vmul.f32 %v279, %v284
        %v286 = vadd.f32 %v276, %v285
        %287 = vset.pattern.permute.xlu0 8
        %288 = vperm.xlu0 %287, %v194
        %v289 = vpop.permute.xlu0 %288
        %v291 = vlaneseq
        %v292 = vshrl.u32 %v291, 7
        %v293 = vsub.s32 0, %v292
        %v294 = vrot.slane %v193, %v293
        %v295 = vmul.f32 %v289, %v294
        %v296 = vadd.f32 %v286, %v295
        %297 = vset.pattern.permute.xlu0 9
        %298 = vperm.xlu0 %297, %v194
        %v299 = vpop.permute.xlu0 %298
        %v301 = vlaneseq
        %v302 = vshrl.u32 %v301, 7
        %v303 = vsub.s32 1, %v302
        %v304 = vrot.slane %v193, %v303
        %v305 = vmul.f32 %v299, %v304
        %v306 = vadd.f32 %v296, %v305
        %307 = vset.pattern.permute.xlu0 10
        %308 = vperm.xlu0 %307, %v194
        %v309 = vpop.permute.xlu0 %308
        %v311 = vlaneseq
        %v312 = vshrl.u32 %v311, 7
        %v313 = vsub.s32 2, %v312
        %v314 = vrot.slane %v193, %v313
        %v315 = vmul.f32 %v309, %v314
        %v316 = vadd.f32 %v306, %v315
        %317 = vset.pattern.permute.xlu0 11
        %318 = vperm.xlu0 %317, %v194
        %v319 = vpop.permute.xlu0 %318
        %v321 = vlaneseq
        %v322 = vshrl.u32 %v321, 7
        %v323 = vsub.s32 3, %v322
        %v324 = vrot.slane %v193, %v323
        %v325 = vmul.f32 %v319, %v324
        %v326 = vadd.f32 %v316, %v325
        %v327 = vld [vmem:[%s2] sm:$0xff]
        %329 = vset.pattern.permute.xlu0 0
        %330 = vperm.xlu0 %329, %v327
        %v331 = vpop.permute.xlu0 %330
        %v333 = vadd.f32 %v326, %v331
        %vm334 = vcmask 130048
        %335 = vst.msk [vmem:[%s188] sm:$0xff] %vm334, %v333
        %s336 = sand.u32 %s108, 1
        %s337 = scalar_lea.sflag [#allocation4], %s336
        %s338 = sand.u32 %s108, 1
        %s339 = smul.addr %s338, 8
        %s340 = scalar_lea.vmem [#allocation5], %s339
        // Predicated region
        $region37: #{tpu_custom_call.1} parent=31 // pred_check
          %p341 = pneg %p118
        $region38: #{tpu_custom_call.1} parent=31 // pred_check_branch
          %343 = sbr.rel (%p341) target = $region40
        $region39: #{tpu_custom_call.1} parent=31 // pred_region
          %s345 = ssub.s32 128, 128
          %346 = vsyncadd %s337, %s345
          %s347 = sadd.s32 %s23, %s22
          %s348 = smul.addr %s347, 128
          %s349 = scalar_lea.hbm %s3, %s348
          %s351 = sshll.u32 %s340, 4
          %s352 = int_to_ptr.vmem [resolvable:$true] %s351
          %354 = dma.vmem_to_hbm [thread:$0]  %s352, 128, %s349, %s337
        $region40: #{tpu_custom_call.1} parent=31 // pred_fallthru
          _
      $region32: #{tpu_custom_call.1} parent=5 // pred_fallthru
        _
      %p355 = scmp.le.s32.totalorder 2, %s13
      // Predicated region
      $region41: #{tpu_custom_call.1} parent=5 // pred_check
        %p356 = pneg %p355
      $region42: #{tpu_custom_call.1} parent=5 // pred_check_branch
        %358 = sbr.rel (%p356) target = $region44
      $region43: #{tpu_custom_call.1} parent=5 // pred_region
        %s359 = ssub.s32 %s13, 2
        // Predicated region
        $region45: #{tpu_custom_call.1} parent=43 // pred_check
          %p360 = pneg %p124
        $region46: #{tpu_custom_call.1} parent=43 // pred_check_branch
          %362 = sbr.rel (%p360) target = $region48
        $region47: #{tpu_custom_call.1} parent=43 // pred_region
          %s363 = sand.u32 %s109, 1
          %s364 = scalar_lea.sflag [#allocation4], %s363
          %s365 = sand.u32 %s109, 1
          %s366 = smul.addr %s365, 8
          %s367 = scalar_lea.vmem [#allocation5], %s366
          %368 = dma.done %s364, 128
        $region48: #{tpu_custom_call.1} parent=43 // pred_fallthru
          _
      $region44: #{tpu_custom_call.1} parent=5 // pred_fallthru
        _
    $region6: #{tpu_custom_call.1} parent=1 // loop_footer
      %s17 = sadd.s32 1, %s13
    $region7: #{tpu_custom_call.1} parent=1 // loop_footer_branch
      %12 = sbr.rel target = $region3
    $region8: #{tpu_custom_call.1} parent=1 // loop_exit
      _
    %369 = vsyncpa [#allocation3], 1
    %s370 = scalar_lea.sflag [#allocation3], 1
    %371 = vsyncpa %s370, 1
    %372 = vsyncpa [#allocation4], 1
    %s373 = scalar_lea.sflag [#allocation4], 1
    %374 = vsyncpa %s373, 1

</llo_original>
